<compile_context>
chip_gen: v7x
topology: tpu7x:2x2x1
jax: 0.10.0
libtpu: 0.0.40
codegen_flags: <defaults>
</compile_context>

<pallas_src>
import functools
import numpy as np
import jax
import jax.numpy as jnp
from jax.experimental import pallas as pl
from jax.experimental.pallas import tpu as pltpu

# Hopper-v2 dimensions (no gym dependency; values are fixed for that env).
STATE_SPACE = 11     # env.observation_space.shape[0]
ACTION_SPACE = 3     # env.action_space.shape[0]
H1 = 400
H2 = 300

# Lane-padded sizes (multiples of 128 on the feature/lane axis).
H1_PAD = 512
H2_PAD = 384
OUT_PAD = 128

_VMEM_LIMIT_BYTES = 48 * 1024 * 1024   # > v5e/v6e/v7x scoped defaults, < v7x physical


def _round_up(n, m):
    return ((n + m - 1) // m) * m


def _cdiv(a, b):
    return -(-a // b)


def _use_bf16_epilogue():
    """bf16 bias-add/ReLU only on chips with a bf16 VALU (v6e / v7x)."""
    try:
        kind = jax.devices()[0].device_kind.lower()
    except Exception:
        return False
    # v2-v5 (incl. v5e "v5 lite"): no bf16 VALU/EUP -> keep the f32 epilogue.
    for old in ("v2", "v3", "v4", "v5"):
        if old in kind:
            return False
    return True


def actor_kernel(x_ref, w1_ref, b1_ref, w2_ref, b2_ref, w3_ref, b3_ref, o_ref,
                 *, bf16_epilogue):
    # fc1 (bf16 operands, f32 MXU accumulation)
    x = x_ref[...].astype(jnp.bfloat16)
    h = jnp.dot(x, w1_ref[...], preferred_element_type=jnp.float32)
    if bf16_epilogue:
        # v6e/v7x: bias-add + ReLU in bf16 -> half the VPU ops and half the
        # VMEM traffic for the (TB, 512)/(TB, 384) intermediates.
        h = jnp.maximum(h.astype(jnp.bfloat16) + b1_ref[...].astype(jnp.bfloat16), 0)
        h = jnp.dot(h, w2_ref[...], preferred_element_type=jnp.float32)
        h = jnp.maximum(h.astype(jnp.bfloat16) + b2_ref[...].astype(jnp.bfloat16), 0)
        h = jnp.dot(h, w3_ref[...], preferred_element_type=jnp.float32)
    else:
        # v5e: f32 epilogue (no bf16 VALU/EUP); MXU hides the VPU work anyway.
        h = jnp.maximum(h + b1_ref[...], 0.0)
        h = jnp.dot(h.astype(jnp.bfloat16), w2_ref[...],
                    preferred_element_type=jnp.float32)
        h = jnp.maximum(h + b2_ref[...], 0.0)
        h = jnp.dot(h.astype(jnp.bfloat16), w3_ref[...],
                    preferred_element_type=jnp.float32)
    # fc3 epilogue: bias + tanh in f32 (only 128 lanes; padded lanes -> tanh(0)=0)
    o_ref[...] = jnp.tanh(h + b3_ref[...])


def _choose_tile(batch, max_tile):
    assert max_tile >= 16 and max_tile % 16 == 0
    b16 = _round_up(batch, 16)            # full bf16 sublane pairs
    if b16 <= min(256, max_tile):
        # Tiny policy-step batches: single tile; weight-DMA / call overhead
        # dominates, splitting would only add grid-step overhead.
        return b16
    # >= 2 grid steps (even count) so ("parallel",) shards the batch evenly
    # across both TensorCores on v7x; neutral on single-TC v5e/v6e.
    n_steps = max(2, _cdiv(b16, max_tile))
    n_steps = _round_up(n_steps, 2)
    tb = _round_up(_cdiv(b16, n_steps), 16)
    return min(tb, max_tile)


def actor_net_forward(x, params, *, max_tile=2048):
    """x: (B, STATE_SPACE) float32.  params: pre-laid-out dict from init_params."""
    B = x.shape[0]
    TB = _choose_tile(B, max_tile)
    B_pad = _round_up(B, TB)
    if B_pad != B:
        x = jnp.pad(x, ((0, B_pad - B), (0, 0)))

    grid = (B_pad // TB,)
    bf16_epi = _use_bf16_epilogue()

    # Advisory cost hint for XLA's scheduler around the custom call.
    flops = 2 * B_pad * (STATE_SPACE * H1_PAD + H1_PAD * H2_PAD + H2_PAD * OUT_PAD)
    param_bytes = sum(int(np.prod(v.shape)) * v.dtype.itemsize
                      for v in params.values())
    bytes_accessed = (B_pad * STATE_SPACE * 4) + param_bytes + (B_pad * OUT_PAD * 4)
    cost = pl.CostEstimate(flops=flops,
                           transcendentals=B_pad * OUT_PAD,
                           bytes_accessed=bytes_accessed)

    out = pl.pallas_call(
        functools.partial(actor_kernel, bf16_epilogue=bf16_epi),
        out_shape=jax.ShapeDtypeStruct((B_pad, OUT_PAD), jnp.float32),
        grid=grid,
        in_specs=[
            # batch-tiled activations
            pl.BlockSpec((TB, STATE_SPACE), lambda i: (i, 0)),
            # weights/biases: constant block index -> DMA'd once, VMEM-resident
            pl.BlockSpec((STATE_SPACE, H1_PAD), lambda i: (0, 0)),
            pl.BlockSpec((1, H1_PAD), lambda i: (0, 0)),
            pl.BlockSpec((H1_PAD, H2_PAD), lambda i: (0, 0)),
            pl.BlockSpec((1, H2_PAD), lambda i: (0, 0)),
            pl.BlockSpec((H2_PAD, OUT_PAD), lambda i: (0, 0)),
            pl.BlockSpec((1, OUT_PAD), lambda i: (0, 0)),
        ],
        out_specs=pl.BlockSpec((TB, OUT_PAD), lambda i: (i, 0)),
        compiler_params=pltpu.CompilerParams(
            dimension_semantics=("parallel",),
            vmem_limit_bytes=_VMEM_LIMIT_BYTES),
        cost_estimate=cost,
    )(x, params["w1"], params["b1"], params["w2"], params["b2"],
      params["w3"], params["b3"])

    # Lane-dense kernel output -> slice down to the real action dim.
    # (Consumers wanting max throughput at B >~ 1e4 can take the padded slab.)
    return out[:B, :ACTION_SPACE]


def init_params(key):
    """Deterministic init mirroring the PyTorch module's init_weight(), then
    packed ONCE into the kernel layout: (in, out_pad) bf16 weights, (1, out_pad)
    f32 biases, zero-padded on the padded dims (preserves the exact forward)."""
    ks = jax.random.split(key, 6)

    def fanin_init(k, size):
        # NB: original code uses fanin = size[0] (= out_features) — replicate that.
        v = 1.0 / np.sqrt(size[0])
        return jax.random.uniform(k, size, jnp.float32, -v, v)

    def linear_bias_init(k, in_features, out_features):
        # nn.Linear default bias init: U(-1/sqrt(in), 1/sqrt(in))
        v = 1.0 / np.sqrt(in_features)
        return jax.random.uniform(k, (out_features,), jnp.float32, -v, v)

    dis = 0.003
    # torch layout (out, in)
    w1 = fanin_init(ks[0], (H1, STATE_SPACE))
    b1 = linear_bias_init(ks[1], STATE_SPACE, H1)
    w2 = fanin_init(ks[2], (H2, H1))
    b2 = linear_bias_init(ks[3], H1, H2)
    w3 = jax.random.uniform(ks[4], (ACTION_SPACE, H2), jnp.float32, -dis, dis)
    b3 = linear_bias_init(ks[5], H2, ACTION_SPACE)

    def pack_w(w, in_pad, out_pad):
        out_f, in_f = w.shape
        wt = jnp.zeros((in_pad, out_pad), jnp.float32).at[:in_f, :out_f].set(w.T)
        return wt.astype(jnp.bfloat16)

    def pack_b(b, out_pad):
        return jnp.zeros((1, out_pad), jnp.float32).at[0, :b.shape[0]].set(b)

    return {
        "w1": pack_w(w1, STATE_SPACE, H1_PAD),   # (11, 512)  bf16
        "b1": pack_b(b1, H1_PAD),                # (1, 512)   f32
        "w2": pack_w(w2, H1_PAD, H2_PAD),        # (512, 384) bf16
        "b2": pack_b(b2, H2_PAD),                # (1, 384)   f32
        "w3": pack_w(w3, H2_PAD, OUT_PAD),       # (384, 128) bf16
        "b3": pack_b(b3, OUT_PAD),               # (1, 128)   f32
    }


def reference_forward(x, p, *, bf16_epilogue):
    """Pure-JAX reference using the SAME packed params and the SAME dtype flow
    as the kernel (f32 MXU accumulation; bf16 or f32 epilogue to match)."""
    h = jnp.dot(x.astype(jnp.bfloat16), p["w1"], preferred_element_type=jnp.float32)
    if bf16_epilogue:
        h = jnp.maximum(h.astype(jnp.bfloat16) + p["b1"].astype(jnp.bfloat16), 0)
        h = jnp.dot(h, p["w2"], preferred_element_type=jnp.float32)
        h = jnp.maximum(h.astype(jnp.bfloat16) + p["b2"].astype(jnp.bfloat16), 0)
        h = jnp.dot(h, p["w3"], preferred_element_type=jnp.float32)
    else:
        h = jnp.maximum(h + p["b1"], 0.0)
        h = jnp.dot(h.astype(jnp.bfloat16), p["w2"], preferred_element_type=jnp.float32)
        h = jnp.maximum(h + p["b2"], 0.0)
        h = jnp.dot(h.astype(jnp.bfloat16), p["w3"], preferred_element_type=jnp.float32)
    return jnp.tanh(h + p["b3"])[:, :ACTION_SPACE]


if __name__ == "__main__":
    key = jax.random.PRNGKey(0)
    pkey, k1, k2, k3 = jax.random.split(key, 4)
    params = init_params(pkey)
    bf16_epi = _use_bf16_epilogue()

    # 1) Small batch (single grid tile).
    x = jax.random.normal(k1, (8, STATE_SPACE), jnp.float32)
    out = jax.block_until_ready(actor_net_forward(x, params))
    ref = reference_forward(x, params, bf16_epilogue=bf16_epi)
    assert out.shape == (8, ACTION_SPACE)
    np.testing.assert_allclose(np.asarray(out), np.asarray(ref), rtol=2e-3, atol=2e-3)

    # 2) Non-divisible batch + multi-tile grid (exercises padding & index_map).
    x2 = jax.random.normal(k2, (40, STATE_SPACE), jnp.float32)
    out2 = jax.block_until_ready(actor_net_forward(x2, params, max_tile=16))
    ref2 = reference_forward(x2, params, bf16_epilogue=bf16_epi)
    assert out2.shape == (40, ACTION_SPACE)
    np.testing.assert_allclose(np.asarray(out2), np.asarray(ref2), rtol=2e-3, atol=2e-3)

    # 3) Mid-size batch: exercises the ">= 2 even grid steps" (v7x megacore) path.
    x3 = jax.random.normal(k3, (300, STATE_SPACE), jnp.float32)
    out3 = jax.block_until_ready(actor_net_forward(x3, params))
    ref3 = reference_forward(x3, params, bf16_epilogue=bf16_epi)
    assert out3.shape == (300, ACTION_SPACE)
    np.testing.assert_allclose(np.asarray(out3), np.asarray(ref3), rtol=2e-3, atol=2e-3)

    print("KERNEL_OK")
</pallas_src>

<mosaic_0001>
module attributes {stable_mosaic.version = 11 : i64} {
  func.func @actor_kernel(%arg0: i32, %arg1: memref<16x11xf32, #tpu.memory_space<vmem>>, %arg2: memref<11x512xbf16, #tpu.memory_space<vmem>>, %arg3: memref<1x512xf32, #tpu.memory_space<vmem>>, %arg4: memref<512x384xbf16, #tpu.memory_space<vmem>>, %arg5: memref<1x384xf32, #tpu.memory_space<vmem>>, %arg6: memref<384x128xbf16, #tpu.memory_space<vmem>>, %arg7: memref<1x128xf32, #tpu.memory_space<vmem>>, %arg8: memref<16x128xf32, #tpu.memory_space<vmem>>) attributes {dimension_semantics = [#tpu.dimension_semantics<parallel>], iteration_bounds = array<i64: 1>, scalar_prefetch = 0 : i64, scratch_operands = 0 : i64, tpu.core_type = #tpu.core_type<tc>, window_params = [{transform_indices = @transform_0, window_bounds = array<i64: 16, 11>}, {pipeline_mode = #tpu.pipeline_mode<synchronous>, transform_indices = @transform_1, window_bounds = array<i64: 11, 512>}, {pipeline_mode = #tpu.pipeline_mode<synchronous>, transform_indices = @transform_2, window_bounds = array<i64: 1, 512>}, {pipeline_mode = #tpu.pipeline_mode<synchronous>, transform_indices = @transform_3, window_bounds = array<i64: 512, 384>}, {pipeline_mode = #tpu.pipeline_mode<synchronous>, transform_indices = @transform_4, window_bounds = array<i64: 1, 384>}, {pipeline_mode = #tpu.pipeline_mode<synchronous>, transform_indices = @transform_5, window_bounds = array<i64: 384, 128>}, {pipeline_mode = #tpu.pipeline_mode<synchronous>, transform_indices = @transform_6, window_bounds = array<i64: 1, 128>}, {transform_indices = @transform_7, window_bounds = array<i64: 16, 128>}]} {
    %c0 = arith.constant 0 : index
    %c0_0 = arith.constant 0 : index
    %0 = vector.load %arg1[%c0, %c0_0] : memref<16x11xf32, #tpu.memory_space<vmem>>, vector<16x11xf32>
    %1 = arith.truncf %0 : vector<16x11xf32> to vector<16x11xbf16>
    %c0_1 = arith.constant 0 : index
    %c0_2 = arith.constant 0 : index
    %2 = vector.load %arg2[%c0_1, %c0_2] : memref<11x512xbf16, #tpu.memory_space<vmem>>, vector<11x512xbf16>
    %cst = arith.constant dense<0.000000e+00> : vector<16x512xf32>
    %3 = tpu.matmul %1, %2, %cst {dimension_numbers = #tpu.dot_dimension_numbers<[1], [0], [0], [1], [0, 0, 1, 1], [], []>} : vector<16x11xbf16>, vector<11x512xbf16>, vector<16x512xf32> -> vector<16x512xf32>
    %4 = arith.truncf %3 : vector<16x512xf32> to vector<16x512xbf16>
    %c0_3 = arith.constant 0 : index
    %c0_4 = arith.constant 0 : index
    %5 = vector.load %arg3[%c0_3, %c0_4] : memref<1x512xf32, #tpu.memory_space<vmem>>, vector<1x512xf32>
    %6 = arith.truncf %5 : vector<1x512xf32> to vector<1x512xbf16>
    %7 = vector.broadcast %6 : vector<1x512xbf16> to vector<16x512xbf16>
    %8 = arith.addf %4, %7 : vector<16x512xbf16>
    %cst_5 = arith.constant 0.000000e+00 : bf16
    %9 = vector.broadcast %cst_5 : bf16 to vector<16x512xbf16>
    %10 = arith.maximumf %8, %9 : vector<16x512xbf16>
    %c0_6 = arith.constant 0 : index
    %c0_7 = arith.constant 0 : index
    %11 = vector.load %arg4[%c0_6, %c0_7] : memref<512x384xbf16, #tpu.memory_space<vmem>>, vector<512x384xbf16>
    %cst_8 = arith.constant dense<0.000000e+00> : vector<16x384xf32>
    %12 = tpu.matmul %10, %11, %cst_8 {dimension_numbers = #tpu.dot_dimension_numbers<[1], [0], [0], [1], [0, 0, 1, 1], [], []>} : vector<16x512xbf16>, vector<512x384xbf16>, vector<16x384xf32> -> vector<16x384xf32>
    %13 = arith.truncf %12 : vector<16x384xf32> to vector<16x384xbf16>
    %c0_9 = arith.constant 0 : index
    %c0_10 = arith.constant 0 : index
    %14 = vector.load %arg5[%c0_9, %c0_10] : memref<1x384xf32, #tpu.memory_space<vmem>>, vector<1x384xf32>
    %15 = arith.truncf %14 : vector<1x384xf32> to vector<1x384xbf16>
    %16 = vector.broadcast %15 : vector<1x384xbf16> to vector<16x384xbf16>
    %17 = arith.addf %13, %16 : vector<16x384xbf16>
    %cst_11 = arith.constant 0.000000e+00 : bf16
    %18 = vector.broadcast %cst_11 : bf16 to vector<16x384xbf16>
    %19 = arith.maximumf %17, %18 : vector<16x384xbf16>
    %c0_12 = arith.constant 0 : index
    %c0_13 = arith.constant 0 : index
    %20 = vector.load %arg6[%c0_12, %c0_13] : memref<384x128xbf16, #tpu.memory_space<vmem>>, vector<384x128xbf16>
    %cst_14 = arith.constant dense<0.000000e+00> : vector<16x128xf32>
    %21 = tpu.matmul %19, %20, %cst_14 {dimension_numbers = #tpu.dot_dimension_numbers<[1], [0], [0], [1], [0, 0, 1, 1], [], []>} : vector<16x384xbf16>, vector<384x128xbf16>, vector<16x128xf32> -> vector<16x128xf32>
    %c0_15 = arith.constant 0 : index
    %c0_16 = arith.constant 0 : index
    %22 = vector.load %arg7[%c0_15, %c0_16] : memref<1x128xf32, #tpu.memory_space<vmem>>, vector<1x128xf32>
    %23 = vector.broadcast %22 : vector<1x128xf32> to vector<16x128xf32>
    %24 = arith.addf %21, %23 : vector<16x128xf32>
    %25 = math.tanh %24 : vector<16x128xf32>
    %c0_17 = arith.constant 0 : index
    %c0_18 = arith.constant 0 : index
    %26 = vector.load %arg8[%c0_17, %c0_18] : memref<16x128xf32, #tpu.memory_space<vmem>>, vector<16x128xf32>
    tpu.vector_store %arg8[%c0_17, %c0_18], %25 {strides = array<i32>} : memref<16x128xf32, #tpu.memory_space<vmem>>, vector<16x128xf32>,
    return
  }
  func.func @transform_0(%arg0: i32) -> (i32, i32) {
    %c0_i32 = arith.constant 0 : i32
    %c0_i32_0 = arith.constant 0 : i32
    return %arg0, %c0_i32 : i32, i32
  }
  func.func @transform_1(%arg0: i32) -> (i32, i32) {
    %c0_i32 = arith.constant 0 : i32
    %c0_i32_0 = arith.constant 0 : i32
    %c0_i32_1 = arith.constant 0 : i32
    return %c0_i32, %c0_i32_0 : i32, i32
  }
  func.func @transform_2(%arg0: i32) -> (i32, i32) {
    %c0_i32 = arith.constant 0 : i32
    %c0_i32_0 = arith.constant 0 : i32
    %c0_i32_1 = arith.constant 0 : i32
    return %c0_i32, %c0_i32_0 : i32, i32
  }
  func.func @transform_3(%arg0: i32) -> (i32, i32) {
    %c0_i32 = arith.constant 0 : i32
    %c0_i32_0 = arith.constant 0 : i32
    %c0_i32_1 = arith.constant 0 : i32
    return %c0_i32, %c0_i32_0 : i32, i32
  }
  func.func @transform_4(%arg0: i32) -> (i32, i32) {
    %c0_i32 = arith.constant 0 : i32
    %c0_i32_0 = arith.constant 0 : i32
    %c0_i32_1 = arith.constant 0 : i32
    return %c0_i32, %c0_i32_0 : i32, i32
  }
  func.func @transform_5(%arg0: i32) -> (i32, i32) {
    %c0_i32 = arith.constant 0 : i32
    %c0_i32_0 = arith.constant 0 : i32
    %c0_i32_1 = arith.constant 0 : i32
    return %c0_i32, %c0_i32_0 : i32, i32
  }
  func.func @transform_6(%arg0: i32) -> (i32, i32) {
    %c0_i32 = arith.constant 0 : i32
    %c0_i32_0 = arith.constant 0 : i32
    %c0_i32_1 = arith.constant 0 : i32
    return %c0_i32, %c0_i32_0 : i32, i32
  }
  func.func @transform_7(%arg0: i32) -> (i32, i32) {
    %c0_i32 = arith.constant 0 : i32
    %c0_i32_0 = arith.constant 0 : i32
    return %arg0, %c0_i32 : i32, i32
  }
}

</mosaic_0001>

<llo_original>
// kernel: tpu_custom_call.1
$region0: #{tpu_custom_call.1}
  #allocation0 [shape = 'u32[]', space=smem, size = 0x4, offset = 0x4, fixed_abs, tag = 'smem constant byte address 0x4 - core index']
  #allocation1 [shape = 'u32[144,128]{1,0:T(1,128)}', space=vmem, size = 0x12000, scoped, tag = 'internal scratch']
  %s0 = inlined_call_operand.hbm [shape: f32[16,11], index: 0, kind: input, shape index: {}]
  %s1 = inlined_call_operand.hbm [shape: bf16[11,512], index: 1, kind: input, shape index: {}]
  %s2 = inlined_call_operand.vmem [shape: f32[1,512], index: 2, kind: input, shape index: {}]
  %s3 = inlined_call_operand.hbm [shape: bf16[512,384], index: 3, kind: input, shape index: {}]
  %s4 = inlined_call_operand.vmem [shape: f32[1,384], index: 4, kind: input, shape index: {}]
  %s5 = inlined_call_operand.hbm [shape: bf16[384,128], index: 5, kind: input, shape index: {}]
  %s6 = inlined_call_operand.vmem [shape: f32[1,128], index: 6, kind: input, shape index: {}]
  %s7 = inlined_call_operand.hbm [shape: f32[16,128], index: 7, kind: output, shape index: {}]
  %s8 = sld [smem:[#allocation0]]
  $region54: #{tpu_custom_call.1} parent=0
    _
  %s10 = ssub.s32 1, %s8
  %s11 = scalar_select 0, %s10, %s8
  $region1: #{tpu_custom_call.1} parent=0
    #allocation2 [shape = 'u8[8192]{0}', space=vmem, size = 0x2000, scoped, tag = 'input window, operand 0, single buffered']
    #allocation3 [shape = 's32[1]{0}', space=sflag, size = 0x4, scoped, tag = 'scoped memory for tpu_custom_call.1']
    #allocation4 [shape = 's32[1]{0}', space=sflag, size = 0x4, scoped, tag = 'scoped memory for tpu_custom_call.1']
    #allocation5 [shape = 'u8[16384]{0}', space=vmem, size = 0x4000, scoped, tag = 'input window, operand 1, single buffered']
    #allocation6 [shape = 's32[1]{0}', space=sflag, size = 0x4, scoped, tag = 'scoped memory for tpu_custom_call.1']
    #allocation7 [shape = 'u8[393216]{0}', space=vmem, size = 0x60000, scoped, tag = 'input window, operand 3, single buffered']
    #allocation8 [shape = 'u8[98304]{0}', space=vmem, size = 0x18000, scoped, tag = 'input window, operand 5, single buffered']
    #allocation9 [shape = 's32[1]{0}', space=sflag, size = 0x4, scoped, tag = 'scoped memory for tpu_custom_call.1']
    #allocation10 [shape = 'u8[8192]{0}', space=vmem, size = 0x2000, scoped, tag = 'output window, operand 0, single buffered']
    %12 = vsyncpa [#allocation3], 0
    %13 = vsyncpa [#allocation6], 0
    %14 = vsyncpa [#allocation9], 0
    %15 = vsyncpa [#allocation4], 0
    // Predicated region
    $region2: #{tpu_custom_call.1} parent=1 // pred_check
      _
    $region3: #{tpu_custom_call.1} parent=1 // pred_check_branch
      %17 = sbr.rel (0) target = $region5
    $region4: #{tpu_custom_call.1} parent=1 // pred_region
      %s19 = ssub.s32 256, 256
      %20 = vsyncadd [#allocation3], %s19
      %s21 = sshll.u32 [#allocation2], 4
      %s22 = int_to_ptr.vmem [resolvable:$true] %s21
      %27 = dma.hbm_to_vmem [thread:$0]  %s0, 256, %s22, [#allocation3], 128, 128, 8
    $region5: #{tpu_custom_call.1} parent=1 // pred_fallthru
      _
    // Predicated region
    $region6: #{tpu_custom_call.1} parent=1 // pred_check
      _
    $region7: #{tpu_custom_call.1} parent=1 // pred_check_branch
      %29 = sbr.rel (0) target = $region9
    $region8: #{tpu_custom_call.1} parent=1 // pred_region
      %s31 = ssub.s32 512, 512
      %32 = vsyncadd [#allocation6], %s31
      %s33 = sshll.u32 [#allocation5], 4
      %s34 = int_to_ptr.vmem [resolvable:$true] %s33
      %39 = dma.hbm_to_vmem [thread:$0]  %s1, 512, %s34, [#allocation6], 256, 256, 16
    $region9: #{tpu_custom_call.1} parent=1 // pred_fallthru
      _
    // Predicated region
    $region10: #{tpu_custom_call.1} parent=1 // pred_check
      _
    $region11: #{tpu_custom_call.1} parent=1 // pred_check_branch
      %41 = sbr.rel (0) target = $region13
    $region12: #{tpu_custom_call.1} parent=1 // pred_region
      _
    $region13: #{tpu_custom_call.1} parent=1 // pred_fallthru
      _
    // Predicated region
    $region14: #{tpu_custom_call.1} parent=1 // pred_check
      _
    $region15: #{tpu_custom_call.1} parent=1 // pred_check_branch
      %43 = sbr.rel (0) target = $region17
    $region16: #{tpu_custom_call.1} parent=1 // pred_region
      %s45 = ssub.s32 12288, 12288
      %46 = vsyncadd [#allocation6], %s45
      %s47 = sshll.u32 [#allocation7], 4
      %s48 = int_to_ptr.vmem [resolvable:$true] %s47
      %53 = dma.hbm_to_vmem [thread:$0]  %s3, 12288, %s48, [#allocation6], 192, 192, 12
    $region17: #{tpu_custom_call.1} parent=1 // pred_fallthru
      _
    // Predicated region
    $region18: #{tpu_custom_call.1} parent=1 // pred_check
      _
    $region19: #{tpu_custom_call.1} parent=1 // pred_check_branch
      %55 = sbr.rel (0) target = $region21
    $region20: #{tpu_custom_call.1} parent=1 // pred_region
      _
    $region21: #{tpu_custom_call.1} parent=1 // pred_fallthru
      _
    // Predicated region
    $region22: #{tpu_custom_call.1} parent=1 // pred_check
      _
    $region23: #{tpu_custom_call.1} parent=1 // pred_check_branch
      %57 = sbr.rel (0) target = $region25
    $region24: #{tpu_custom_call.1} parent=1 // pred_region
      %s59 = ssub.s32 3072, 3072
      %60 = vsyncadd [#allocation9], %s59
      %s61 = sshll.u32 [#allocation8], 4
      %s62 = int_to_ptr.vmem [resolvable:$true] %s61
      %67 = dma.hbm_to_vmem [thread:$0]  %s5, 3072, %s62, [#allocation9], 64, 64, 4
    $region25: #{tpu_custom_call.1} parent=1 // pred_fallthru
      _
    // Predicated region
    $region26: #{tpu_custom_call.1} parent=1 // pred_check
      _
    $region27: #{tpu_custom_call.1} parent=1 // pred_check_branch
      %69 = sbr.rel (0) target = $region29
    $region28: #{tpu_custom_call.1} parent=1 // pred_region
      _
    $region29: #{tpu_custom_call.1} parent=1 // pred_fallthru
      _
    // Predicated region
    $region30: #{tpu_custom_call.1} parent=1 // pred_check
      _
    $region31: #{tpu_custom_call.1} parent=1 // pred_check_branch
      %71 = sbr.rel (0) target = $region33
    $region32: #{tpu_custom_call.1} parent=1 // pred_region
      %72 = dma.done [#allocation3], 256
    $region33: #{tpu_custom_call.1} parent=1 // pred_fallthru
      _
    // Predicated region
    $region34: #{tpu_custom_call.1} parent=1 // pred_check
      _
    $region35: #{tpu_custom_call.1} parent=1 // pred_check_branch
      %74 = sbr.rel (0) target = $region37
    $region36: #{tpu_custom_call.1} parent=1 // pred_region
      %75 = dma.done [#allocation6], 512
    $region37: #{tpu_custom_call.1} parent=1 // pred_fallthru
      _
    // Predicated region
    $region38: #{tpu_custom_call.1} parent=1 // pred_check
      _
    $region39: #{tpu_custom_call.1} parent=1 // pred_check_branch
      %77 = sbr.rel (0) target = $region41
    $region40: #{tpu_custom_call.1} parent=1 // pred_region
      %78 = dma.done [#allocation6], 12288
    $region41: #{tpu_custom_call.1} parent=1 // pred_fallthru
      _
    // Predicated region
    $region42: #{tpu_custom_call.1} parent=1 // pred_check
      _
    $region43: #{tpu_custom_call.1} parent=1 // pred_check_branch
      %80 = sbr.rel (0) target = $region45
    $region44: #{tpu_custom_call.1} parent=1 // pred_region
      %81 = dma.done [#allocation9], 3072
    $region45: #{tpu_custom_call.1} parent=1 // pred_fallthru
      _
    %v83 = vld [vmem:[#allocation2] sm:$0xff]
    %v84 = vld [vmem:[#allocation2 + $0x8] sm:$0xff]
    %v85 = vpack.c.bf16 %v84, %v83
    %v86 = vld [vmem:[#allocation5] sm:$0xff]
    %v87 = vld [vmem:[#allocation5 + $0x8] sm:$0xff]
    %v88 = vld [vmem:[#allocation5 + $0x10] sm:$0x33]
    %v89 = vld [vmem:[#allocation5 + $0x18] sm:$0x33]
    %v94 = vunpack.c.l.b16 %v86
    %v95 = vunpack.c.h.b16 %v86
    %v96 = vunpack.c.l.b16 %v87
    %v97 = vunpack.c.h.b16 %v87
    %v98 = vunpack.c.l.b16 %v88
    %v99 = vunpack.c.h.b16 %v88
    %v100 = vunpack.c.l.b16 %v89
    %v101 = vunpack.c.h.b16 %v89
    %v102 = vpack.c.b16 %v98, %v94
    %v103 = vpack.c.b16 %v99, %v95
    %v104 = vpack.c.b16 %v100, %v96
    %v105 = vpack.c.b16 %v101, %v97
    %vm106 = vcmask 89088
    %v108 = vsel %vm106, %v85, 0
    %vm110 = vcmask 1044480
    %vm111 = vcmask 1045504
    %v112 = vsel %vm110, 4294967295, 65535
    %v113 = vsel %vm111, %v112, 0
    %v115 = vand.u32 %v102, %v113
    %v118 = vand.u32 %v103, %v113
    %v121 = vand.u32 %v104, %v113
    %v124 = vand.u32 %v105, %v113
    %126 = vmatprep.subr.bf16.mxu0 %v118
    %127 = vmatpush1.bf16.msra.mxu0 %v115
    %128 = vmatprep.subr.bf16.mxu0 0
    %129 = vmatpush1.bf16.msra.mxu0 0
    %130 = vmatprep.subr.bf16.mxu0 0
    %131 = vmatpush1.bf16.msra.mxu0 0
    %132 = vmatprep.subr.bf16.mxu0 0
    %133 = vmatpush1.bf16.msra.mxu0 0
    %134 = vmatprep.subr.bf16.mxu0 0
    %135 = vmatpush1.bf16.msra.mxu0 0
    %136 = vmatprep.subr.bf16.mxu0 0
    %137 = vmatpush1.bf16.msra.mxu0 0
    %138 = vmatprep.subr.bf16.mxu0 0
    %139 = vmatpush1.bf16.msra.mxu0 0
    %140 = vmatprep.subr.bf16.mxu0 0
    %141 = vmatpush1.bf16.msra.mxu0 0
    %142 = vmatprep.subr.bf16.mxu0 0
    %143 = vmatpush1.bf16.msra.mxu0 0
    %144 = vmatprep.subr.bf16.mxu0 0
    %145 = vmatpush1.bf16.msra.mxu0 0
    %146 = vmatprep.subr.bf16.mxu0 0
    %147 = vmatpush1.bf16.msra.mxu0 0
    %148 = vmatprep.subr.bf16.mxu0 0
    %149 = vmatpush1.bf16.msra.mxu0 0
    %150 = vmatprep.subr.bf16.mxu0 0
    %151 = vmatpush1.bf16.msra.mxu0 0
    %152 = vmatprep.subr.bf16.mxu0 0
    %153 = vmatpush1.bf16.msra.mxu0 0
    %154 = vmatprep.subr.bf16.mxu0 0
    %155 = vmatpush1.bf16.msra.mxu0 0
    %156 = vmatprep.subr.bf16.mxu0 0
    %157 = vmatpush1.bf16.msra.mxu0 0
    %158 = vmatprep.mubr.bf16.mxu0 0
    %159 = vmatmul.mubr.bf16.gmra.mrb[0].mxu0 %v108
    %v160 = vpop.f32.mrb[0].mxu0
    %v161 = vadd.f32 0.0, %v160
    %v162 = vpop.f32.mrb[0].mxu0
    %v163 = vadd.f32 0.0, %v162
    %v164 = vpop.f32.mrb[0].mxu0
    %v165 = vadd.f32 0.0, %v164
    %v166 = vpop.f32.mrb[0].mxu0
    %v167 = vadd.f32 0.0, %v166
    %168 = vdwg.mxu0
    %169 = vmatprep.subr.bf16.mxu0 %v124
    %170 = vmatpush1.bf16.msra.mxu0 %v121
    %171 = vmatprep.subr.bf16.mxu0 0
    %172 = vmatpush1.bf16.msra.mxu0 0
    %173 = vmatprep.subr.bf16.mxu0 0
    %174 = vmatpush1.bf16.msra.mxu0 0
    %175 = vmatprep.subr.bf16.mxu0 0
    %176 = vmatpush1.bf16.msra.mxu0 0
    %177 = vmatprep.subr.bf16.mxu0 0
    %178 = vmatpush1.bf16.msra.mxu0 0
    %179 = vmatprep.subr.bf16.mxu0 0
    %180 = vmatpush1.bf16.msra.mxu0 0
    %181 = vmatprep.subr.bf16.mxu0 0
    %182 = vmatpush1.bf16.msra.mxu0 0
    %183 = vmatprep.subr.bf16.mxu0 0
    %184 = vmatpush1.bf16.msra.mxu0 0
    %185 = vmatprep.subr.bf16.mxu0 0
    %186 = vmatpush1.bf16.msra.mxu0 0
    %187 = vmatprep.subr.bf16.mxu0 0
    %188 = vmatpush1.bf16.msra.mxu0 0
    %189 = vmatprep.subr.bf16.mxu0 0
    %190 = vmatpush1.bf16.msra.mxu0 0
    %191 = vmatprep.subr.bf16.mxu0 0
    %192 = vmatpush1.bf16.msra.mxu0 0
    %193 = vmatprep.subr.bf16.mxu0 0
    %194 = vmatpush1.bf16.msra.mxu0 0
    %195 = vmatprep.subr.bf16.mxu0 0
    %196 = vmatpush1.bf16.msra.mxu0 0
    %197 = vmatprep.subr.bf16.mxu0 0
    %198 = vmatpush1.bf16.msra.mxu0 0
    %199 = vmatprep.subr.bf16.mxu0 0
    %200 = vmatpush1.bf16.msra.mxu0 0
    %201 = vmatprep.mubr.bf16.mxu0 0
    %202 = vmatmul.mubr.bf16.gmra.mrb[0].mxu0 %v108
    %v203 = vpop.f32.mrb[0].mxu0
    %v204 = vadd.f32 0.0, %v203
    %v205 = vpop.f32.mrb[0].mxu0
    %v206 = vadd.f32 0.0, %v205
    %v207 = vpop.f32.mrb[0].mxu0
    %v208 = vadd.f32 0.0, %v207
    %v209 = vpop.f32.mrb[0].mxu0
    %v210 = vadd.f32 0.0, %v209
    %211 = vdwg.mxu0
    %v212 = vpack.c.bf16 %v165, %v161
    %v213 = vpack.c.bf16 %v167, %v163
    %v214 = vpack.c.bf16 %v208, %v204
    %v215 = vpack.c.bf16 %v210, %v206
    %v216 = vld [vmem:[%s2] sm:$0xf]
    %v218 = vlaneseq
    %v219 = vshrl.u32 %v218, 7
    %v220 = vsub.s32 0, %v219
    %v221 = vrot.slane %v216, %v220
    %v222 = vlaneseq
    %v223 = vshrl.u32 %v222, 7
    %v224 = vsub.s32 1, %v223
    %v225 = vrot.slane %v216, %v224
    %v226 = vlaneseq
    %v227 = vshrl.u32 %v226, 7
    %v228 = vsub.s32 2, %v227
    %v229 = vrot.slane %v216, %v228
    %v230 = vlaneseq
    %v231 = vshrl.u32 %v230, 7
    %v232 = vsub.s32 3, %v231
    %v233 = vrot.slane %v216, %v232
    %v238 = vpack.c.bf16 %v221, %v221
    %v239 = vpack.c.bf16 %v225, %v225
    %v240 = vpack.c.bf16 %v229, %v229
    %v241 = vpack.c.bf16 %v233, %v233
    %v243 = vpack.i.b16 %v238, %v238
    %v245 = vlaneseq
    %v246 = vshrl.u32 %v245, 7
    %v247 = vsub.s32 0, %v246
    %v248 = vrot.slane %v243, %v247
    %v250 = vpack.i.b16 %v239, %v239
    %v252 = vlaneseq
    %v253 = vshrl.u32 %v252, 7
    %v254 = vsub.s32 0, %v253
    %v255 = vrot.slane %v250, %v254
    %v257 = vpack.i.b16 %v240, %v240
    %v259 = vlaneseq
    %v260 = vshrl.u32 %v259, 7
    %v261 = vsub.s32 0, %v260
    %v262 = vrot.slane %v257, %v261
    %v264 = vpack.i.b16 %v241, %v241
    %v266 = vlaneseq
    %v267 = vshrl.u32 %v266, 7
    %v268 = vsub.s32 0, %v267
    %v269 = vrot.slane %v264, %v268
    %v270 = vadd.bf16 %v212, %v248
    %v271 = vadd.bf16 %v213, %v255
    %v272 = vadd.bf16 %v214, %v262
    %v273 = vadd.bf16 %v215, %v269
    %v274 = vmax.bf16 %v270, 0
    %v275 = vmax.bf16 %v271, 0
    %v276 = vmax.bf16 %v272, 0
    %v277 = vmax.bf16 %v273, 0
    %v278 = vld [vmem:[#allocation7] sm:$0xff]
    %v279 = vld [vmem:[#allocation7 + $0x8] sm:$0xf]
    %v280 = vld [vmem:[#allocation7 + $0xc] sm:$0xff]
    %v281 = vld [vmem:[#allocation7 + $0x14] sm:$0xf]
    %v282 = vld [vmem:[#allocation7 + $0x18] sm:$0xff]
    %v283 = vld [vmem:[#allocation7 + $0x20] sm:$0xf]
    %v284 = vld [vmem:[#allocation7 + $0x24] sm:$0xff]
    %v285 = vld [vmem:[#allocation7 + $0x2c] sm:$0xf]
    %v286 = vld [vmem:[#allocation7 + $0x30] sm:$0xff]
    %v287 = vld [vmem:[#allocation7 + $0x38] sm:$0xf]
    %v288 = vld [vmem:[#allocation7 + $0x3c] sm:$0xff]
    %v289 = vld [vmem:[#allocation7 + $0x44] sm:$0xf]
    %v290 = vld [vmem:[#allocation7 + $0x48] sm:$0xff]
    %v291 = vld [vmem:[#allocation7 + $0x50] sm:$0xf]
    %v292 = vld [vmem:[#allocation7 + $0x54] sm:$0xff]
    %v293 = vld [vmem:[#allocation7 + $0x5c] sm:$0xf]
    %v294 = vld [vmem:[#allocation7 + $0x60] sm:$0xff]
    %v295 = vld [vmem:[#allocation7 + $0x68] sm:$0xf]
    %v296 = vld [vmem:[#allocation7 + $0x6c] sm:$0xff]
    %v297 = vld [vmem:[#allocation7 + $0x74] sm:$0xf]
    %v298 = vld [vmem:[#allocation7 + $0x78] sm:$0xff]
    %v299 = vld [vmem:[#allocation7 + $0x80] sm:$0xf]
    %v300 = vld [vmem:[#allocation7 + $0x84] sm:$0xff]
    %v301 = vld [vmem:[#allocation7 + $0x8c] sm:$0xf]
    %v302 = vld [vmem:[#allocation7 + $0x90] sm:$0xff]
    %v303 = vld [vmem:[#allocation7 + $0x98] sm:$0xf]
    %v304 = vld [vmem:[#allocation7 + $0x9c] sm:$0xff]
    %v305 = vld [vmem:[#allocation7 + $0xa4] sm:$0xf]
    %v306 = vld [vmem:[#allocation7 + $0xa8] sm:$0xff]
    %v307 = vld [vmem:[#allocation7 + $0xb0] sm:$0xf]
    %v308 = vld [vmem:[#allocation7 + $0xb4] sm:$0xff]
    %v309 = vld [vmem:[#allocation7 + $0xbc] sm:$0xf]
    %v310 = vld [vmem:[#allocation7 + $0xc0] sm:$0xff]
    %v311 = vld [vmem:[#allocation7 + $0xc8] sm:$0xf]
    %v312 = vld [vmem:[#allocation7 + $0xcc] sm:$0xff]
    %v313 = vld [vmem:[#allocation7 + $0xd4] sm:$0xf]
    %v314 = vld [vmem:[#allocation7 + $0xd8] sm:$0xff]
    %v315 = vld [vmem:[#allocation7 + $0xe0] sm:$0xf]
    %v316 = vld [vmem:[#allocation7 + $0xe4] sm:$0xff]
    %v317 = vld [vmem:[#allocation7 + $0xec] sm:$0xf]
    %v318 = vld [vmem:[#allocation7 + $0xf0] sm:$0xff]
    %v319 = vld [vmem:[#allocation7 + $0xf8] sm:$0xf]
    %v320 = vld [vmem:[#allocation7 + $0xfc] sm:$0xff]
    %v321 = vld [vmem:[#allocation7 + $0x104] sm:$0xf]
    %v322 = vld [vmem:[#allocation7 + $0x108] sm:$0xff]
    %v323 = vld [vmem:[#allocation7 + $0x110] sm:$0xf]
    %v324 = vld [vmem:[#allocation7 + $0x114] sm:$0xff]
    %v325 = vld [vmem:[#allocation7 + $0x11c] sm:$0xf]
    %v326 = vld [vmem:[#allocation7 + $0x120] sm:$0xff]
    %v327 = vld [vmem:[#allocation7 + $0x128] sm:$0xf]
    %v328 = vld [vmem:[#allocation7 + $0x12c] sm:$0xff]
    %v329 = vld [vmem:[#allocation7 + $0x134] sm:$0xf]
    %v330 = vld [vmem:[#allocation7 + $0x138] sm:$0xff]
    %v331 = vld [vmem:[#allocation7 + $0x140] sm:$0xf]
    %v332 = vld [vmem:[#allocation7 + $0x144] sm:$0xff]
    %v333 = vld [vmem:[#allocation7 + $0x14c] sm:$0xf]
    %v334 = vld [vmem:[#allocation7 + $0x150] sm:$0xff]
    %v335 = vld [vmem:[#allocation7 + $0x158] sm:$0xf]
    %v336 = vld [vmem:[#allocation7 + $0x15c] sm:$0xff]
    %v337 = vld [vmem:[#allocation7 + $0x164] sm:$0xf]
    %v338 = vld [vmem:[#allocation7 + $0x168] sm:$0xff]
    %v339 = vld [vmem:[#allocation7 + $0x170] sm:$0xf]
    %v340 = vld [vmem:[#allocation7 + $0x174] sm:$0xff]
    %v341 = vld [vmem:[#allocation7 + $0x17c] sm:$0xf]
    %v342 = vld [vmem:[#allocation7 + $0x180] sm:$0xff]
    %v343 = vld [vmem:[#allocation7 + $0x188] sm:$0xf]
    %v344 = vld [vmem:[#allocation7 + $0x18c] sm:$0xff]
    %v345 = vld [vmem:[#allocation7 + $0x194] sm:$0xf]
    %v346 = vld [vmem:[#allocation7 + $0x198] sm:$0xff]
    %v347 = vld [vmem:[#allocation7 + $0x1a0] sm:$0xf]
    %v348 = vld [vmem:[#allocation7 + $0x1a4] sm:$0xff]
    %v349 = vld [vmem:[#allocation7 + $0x1ac] sm:$0xf]
    %v350 = vld [vmem:[#allocation7 + $0x1b0] sm:$0xff]
    %v351 = vld [vmem:[#allocation7 + $0x1b8] sm:$0xf]
    %v352 = vld [vmem:[#allocation7 + $0x1bc] sm:$0xff]
    %v353 = vld [vmem:[#allocation7 + $0x1c4] sm:$0xf]
    %v354 = vld [vmem:[#allocation7 + $0x1c8] sm:$0xff]
    %v355 = vld [vmem:[#allocation7 + $0x1d0] sm:$0xf]
    %v356 = vld [vmem:[#allocation7 + $0x1d4] sm:$0xff]
    %v357 = vld [vmem:[#allocation7 + $0x1dc] sm:$0xf]
    %v358 = vld [vmem:[#allocation7 + $0x1e0] sm:$0xff]
    %v359 = vld [vmem:[#allocation7 + $0x1e8] sm:$0xf]
    %v360 = vld [vmem:[#allocation7 + $0x1ec] sm:$0xff]
    %v361 = vld [vmem:[#allocation7 + $0x1f4] sm:$0xf]
    %v362 = vld [vmem:[#allocation7 + $0x1f8] sm:$0xff]
    %v363 = vld [vmem:[#allocation7 + $0x200] sm:$0xf]
    %v364 = vld [vmem:[#allocation7 + $0x204] sm:$0xff]
    %v365 = vld [vmem:[#allocation7 + $0x20c] sm:$0xf]
    %v366 = vld [vmem:[#allocation7 + $0x210] sm:$0xff]
    %v367 = vld [vmem:[#allocation7 + $0x218] sm:$0xf]
    %v368 = vld [vmem:[#allocation7 + $0x21c] sm:$0xff]
    %v369 = vld [vmem:[#allocation7 + $0x224] sm:$0xf]
    %v370 = vld [vmem:[#allocation7 + $0x228] sm:$0xff]
    %v371 = vld [vmem:[#allocation7 + $0x230] sm:$0xf]
    %v372 = vld [vmem:[#allocation7 + $0x234] sm:$0xff]
    %v373 = vld [vmem:[#allocation7 + $0x23c] sm:$0xf]
    %v374 = vld [vmem:[#allocation7 + $0x240] sm:$0xff]
    %v375 = vld [vmem:[#allocation7 + $0x248] sm:$0xf]
    %v376 = vld [vmem:[#allocation7 + $0x24c] sm:$0xff]
    %v377 = vld [vmem:[#allocation7 + $0x254] sm:$0xf]
    %v378 = vld [vmem:[#allocation7 + $0x258] sm:$0xff]
    %v379 = vld [vmem:[#allocation7 + $0x260] sm:$0xf]
    %v380 = vld [vmem:[#allocation7 + $0x264] sm:$0xff]
    %v381 = vld [vmem:[#allocation7 + $0x26c] sm:$0xf]
    %v382 = vld [vmem:[#allocation7 + $0x270] sm:$0xff]
    %v383 = vld [vmem:[#allocation7 + $0x278] sm:$0xf]
    %v384 = vld [vmem:[#allocation7 + $0x27c] sm:$0xff]
    %v385 = vld [vmem:[#allocation7 + $0x284] sm:$0xf]
    %v386 = vld [vmem:[#allocation7 + $0x288] sm:$0xff]
    %v387 = vld [vmem:[#allocation7 + $0x290] sm:$0xf]
    %v388 = vld [vmem:[#allocation7 + $0x294] sm:$0xff]
    %v389 = vld [vmem:[#allocation7 + $0x29c] sm:$0xf]
    %v390 = vld [vmem:[#allocation7 + $0x2a0] sm:$0xff]
    %v391 = vld [vmem:[#allocation7 + $0x2a8] sm:$0xf]
    %v392 = vld [vmem:[#allocation7 + $0x2ac] sm:$0xff]
    %v393 = vld [vmem:[#allocation7 + $0x2b4] sm:$0xf]
    %v394 = vld [vmem:[#allocation7 + $0x2b8] sm:$0xff]
    %v395 = vld [vmem:[#allocation7 + $0x2c0] sm:$0xf]
    %v396 = vld [vmem:[#allocation7 + $0x2c4] sm:$0xff]
    %v397 = vld [vmem:[#allocation7 + $0x2cc] sm:$0xf]
    %v398 = vld [vmem:[#allocation7 + $0x2d0] sm:$0xff]
    %v399 = vld [vmem:[#allocation7 + $0x2d8] sm:$0xf]
    %v400 = vld [vmem:[#allocation7 + $0x2dc] sm:$0xff]
    %v401 = vld [vmem:[#allocation7 + $0x2e4] sm:$0xf]
    %v402 = vld [vmem:[#allocation7 + $0x2e8] sm:$0xff]
    %v403 = vld [vmem:[#allocation7 + $0x2f0] sm:$0xf]
    %v404 = vld [vmem:[#allocation7 + $0x2f4] sm:$0xff]
    %v405 = vld [vmem:[#allocation7 + $0x2fc] sm:$0xf]
    %v534 = vunpack.c.l.b16 %v278
    %v535 = vunpack.c.h.b16 %v278
    %v536 = vunpack.c.l.b16 %v279
    %v537 = vunpack.c.l.b16 %v280
    %v538 = vunpack.c.h.b16 %v280
    %v539 = vunpack.c.l.b16 %v281
    %v540 = vunpack.c.l.b16 %v282
    %v541 = vunpack.c.h.b16 %v282
    %v542 = vunpack.c.l.b16 %v283
    %v543 = vunpack.c.l.b16 %v284
    %v544 = vunpack.c.h.b16 %v284
    %v545 = vunpack.c.l.b16 %v285
    %v546 = vunpack.c.l.b16 %v286
    %v547 = vunpack.c.h.b16 %v286
    %v548 = vunpack.c.l.b16 %v287
    %v549 = vunpack.c.l.b16 %v288
    %v550 = vunpack.c.h.b16 %v288
    %v551 = vunpack.c.l.b16 %v289
    %v552 = vunpack.c.l.b16 %v290
    %v553 = vunpack.c.h.b16 %v290
    %v554 = vunpack.c.l.b16 %v291
    %v555 = vunpack.c.l.b16 %v292
    %v556 = vunpack.c.h.b16 %v292
    %v557 = vunpack.c.l.b16 %v293
    %v558 = vunpack.c.l.b16 %v294
    %v559 = vunpack.c.h.b16 %v294
    %v560 = vunpack.c.l.b16 %v295
    %v561 = vunpack.c.l.b16 %v296
    %v562 = vunpack.c.h.b16 %v296
    %v563 = vunpack.c.l.b16 %v297
    %v564 = vunpack.c.l.b16 %v298
    %v565 = vunpack.c.h.b16 %v298
    %v566 = vunpack.c.l.b16 %v299
    %v567 = vunpack.c.l.b16 %v300
    %v568 = vunpack.c.h.b16 %v300
    %v569 = vunpack.c.l.b16 %v301
    %v570 = vunpack.c.l.b16 %v302
    %v571 = vunpack.c.h.b16 %v302
    %v572 = vunpack.c.l.b16 %v303
    %v573 = vunpack.c.l.b16 %v304
    %v574 = vunpack.c.h.b16 %v304
    %v575 = vunpack.c.l.b16 %v305
    %v576 = vunpack.c.l.b16 %v306
    %v577 = vunpack.c.h.b16 %v306
    %v578 = vunpack.c.l.b16 %v307
    %v579 = vunpack.c.l.b16 %v308
    %v580 = vunpack.c.h.b16 %v308
    %v581 = vunpack.c.l.b16 %v309
    %v582 = vunpack.c.l.b16 %v310
    %v583 = vunpack.c.h.b16 %v310
    %v584 = vunpack.c.l.b16 %v311
    %v585 = vunpack.c.l.b16 %v312
    %v586 = vunpack.c.h.b16 %v312
    %v587 = vunpack.c.l.b16 %v313
    %v588 = vunpack.c.l.b16 %v314
    %v589 = vunpack.c.h.b16 %v314
    %v590 = vunpack.c.l.b16 %v315
    %v591 = vunpack.c.l.b16 %v316
    %v592 = vunpack.c.h.b16 %v316
    %v593 = vunpack.c.l.b16 %v317
    %v594 = vunpack.c.l.b16 %v318
    %v595 = vunpack.c.h.b16 %v318
    %v596 = vunpack.c.l.b16 %v319
    %v597 = vunpack.c.l.b16 %v320
    %v598 = vunpack.c.h.b16 %v320
    %v599 = vunpack.c.l.b16 %v321
    %v600 = vunpack.c.l.b16 %v322
    %v601 = vunpack.c.h.b16 %v322
    %v602 = vunpack.c.l.b16 %v323
    %v603 = vunpack.c.l.b16 %v324
    %v604 = vunpack.c.h.b16 %v324
    %v605 = vunpack.c.l.b16 %v325
    %v606 = vunpack.c.l.b16 %v326
    %v607 = vunpack.c.h.b16 %v326
    %v608 = vunpack.c.l.b16 %v327
    %v609 = vunpack.c.l.b16 %v328
    %v610 = vunpack.c.h.b16 %v328
    %v611 = vunpack.c.l.b16 %v329
    %v612 = vunpack.c.l.b16 %v330
    %v613 = vunpack.c.h.b16 %v330
    %v614 = vunpack.c.l.b16 %v331
    %v615 = vunpack.c.l.b16 %v332
    %v616 = vunpack.c.h.b16 %v332
    %v617 = vunpack.c.l.b16 %v333
    %v618 = vunpack.c.l.b16 %v334
    %v619 = vunpack.c.h.b16 %v334
    %v620 = vunpack.c.l.b16 %v335
    %v621 = vunpack.c.l.b16 %v336
    %v622 = vunpack.c.h.b16 %v336
    %v623 = vunpack.c.l.b16 %v337
    %v624 = vunpack.c.l.b16 %v338
    %v625 = vunpack.c.h.b16 %v338
    %v626 = vunpack.c.l.b16 %v339
    %v627 = vunpack.c.l.b16 %v340
    %v628 = vunpack.c.h.b16 %v340
    %v629 = vunpack.c.l.b16 %v341
    %v630 = vunpack.c.l.b16 %v342
    %v631 = vunpack.c.h.b16 %v342
    %v632 = vunpack.c.l.b16 %v343
    %v633 = vunpack.c.l.b16 %v344
    %v634 = vunpack.c.h.b16 %v344
    %v635 = vunpack.c.l.b16 %v345
    %v636 = vunpack.c.l.b16 %v346
    %v637 = vunpack.c.h.b16 %v346
    %v638 = vunpack.c.l.b16 %v347
    %v639 = vunpack.c.l.b16 %v348
    %v640 = vunpack.c.h.b16 %v348
    %v641 = vunpack.c.l.b16 %v349
    %v642 = vunpack.c.l.b16 %v350
    %v643 = vunpack.c.h.b16 %v350
    %v644 = vunpack.c.l.b16 %v351
    %v645 = vunpack.c.l.b16 %v352
    %v646 = vunpack.c.h.b16 %v352
    %v647 = vunpack.c.l.b16 %v353
    %v648 = vunpack.c.l.b16 %v354
    %v649 = vunpack.c.h.b16 %v354
    %v650 = vunpack.c.l.b16 %v355
    %v651 = vunpack.c.l.b16 %v356
    %v652 = vunpack.c.h.b16 %v356
    %v653 = vunpack.c.l.b16 %v357
    %v654 = vunpack.c.l.b16 %v358
    %v655 = vunpack.c.h.b16 %v358
    %v656 = vunpack.c.l.b16 %v359
    %v657 = vunpack.c.l.b16 %v360
    %v658 = vunpack.c.h.b16 %v360
    %v659 = vunpack.c.l.b16 %v361
    %v660 = vunpack.c.l.b16 %v362
    %v661 = vunpack.c.h.b16 %v362
    %v662 = vunpack.c.l.b16 %v363
    %v663 = vunpack.c.l.b16 %v364
    %v664 = vunpack.c.h.b16 %v364
    %v665 = vunpack.c.l.b16 %v365
    %v666 = vunpack.c.l.b16 %v366
    %v667 = vunpack.c.h.b16 %v366
    %v668 = vunpack.c.l.b16 %v367
    %v669 = vunpack.c.l.b16 %v368
    %v670 = vunpack.c.h.b16 %v368
    %v671 = vunpack.c.l.b16 %v369
    %v672 = vunpack.c.l.b16 %v370
    %v673 = vunpack.c.h.b16 %v370
    %v674 = vunpack.c.l.b16 %v371
    %v675 = vunpack.c.l.b16 %v372
    %v676 = vunpack.c.h.b16 %v372
    %v677 = vunpack.c.l.b16 %v373
    %v678 = vunpack.c.l.b16 %v374
    %v679 = vunpack.c.h.b16 %v374
    %v680 = vunpack.c.l.b16 %v375
    %v681 = vunpack.c.l.b16 %v376
    %v682 = vunpack.c.h.b16 %v376
    %v683 = vunpack.c.l.b16 %v377
    %v684 = vunpack.c.l.b16 %v378
    %v685 = vunpack.c.h.b16 %v378
    %v686 = vunpack.c.l.b16 %v379
    %v687 = vunpack.c.l.b16 %v380
    %v688 = vunpack.c.h.b16 %v380
    %v689 = vunpack.c.l.b16 %v381
    %v690 = vunpack.c.l.b16 %v382
    %v691 = vunpack.c.h.b16 %v382
    %v692 = vunpack.c.l.b16 %v383
    %v693 = vunpack.c.l.b16 %v384
    %v694 = vunpack.c.h.b16 %v384
    %v695 = vunpack.c.l.b16 %v385
    %v696 = vunpack.c.l.b16 %v386
    %v697 = vunpack.c.h.b16 %v386
    %v698 = vunpack.c.l.b16 %v387
    %v699 = vunpack.c.l.b16 %v388
    %v700 = vunpack.c.h.b16 %v388
    %v701 = vunpack.c.l.b16 %v389
    %v702 = vunpack.c.l.b16 %v390
    %v703 = vunpack.c.h.b16 %v390
    %v704 = vunpack.c.l.b16 %v391
    %v705 = vunpack.c.l.b16 %v392
    %v706 = vunpack.c.h.b16 %v392
    %v707 = vunpack.c.l.b16 %v393
    %v708 = vunpack.c.l.b16 %v394
    %v709 = vunpack.c.h.b16 %v394
    %v710 = vunpack.c.l.b16 %v395
    %v711 = vunpack.c.l.b16 %v396
    %v712 = vunpack.c.h.b16 %v396
    %v713 = vunpack.c.l.b16 %v397
    %v714 = vunpack.c.l.b16 %v398
    %v715 = vunpack.c.h.b16 %v398
    %v716 = vunpack.c.l.b16 %v399
    %v717 = vunpack.c.l.b16 %v400
    %v718 = vunpack.c.h.b16 %v400
    %v719 = vunpack.c.l.b16 %v401
    %v720 = vunpack.c.l.b16 %v402
    %v721 = vunpack.c.h.b16 %v402
    %v722 = vunpack.c.l.b16 %v403
    %v723 = vunpack.c.l.b16 %v404
    %v724 = vunpack.c.h.b16 %v404
    %v725 = vunpack.c.l.b16 %v405
    %v726 = vpack.c.b16 %v537, %v534
    %v727 = vpack.c.b16 %v538, %v535
    %v728 = vpack.c.b16 %v539, %v536
    %v729 = vpack.c.b16 %v543, %v540
    %v730 = vpack.c.b16 %v544, %v541
    %v731 = vpack.c.b16 %v545, %v542
    %v732 = vpack.c.b16 %v549, %v546
    %v733 = vpack.c.b16 %v550, %v547
    %v734 = vpack.c.b16 %v551, %v548
    %v735 = vpack.c.b16 %v555, %v552
    %v736 = vpack.c.b16 %v556, %v553
    %v737 = vpack.c.b16 %v557, %v554
    %v738 = vpack.c.b16 %v561, %v558
    %v739 = vpack.c.b16 %v562, %v559
    %v740 = vpack.c.b16 %v563, %v560
    %v741 = vpack.c.b16 %v567, %v564
    %v742 = vpack.c.b16 %v568, %v565
    %v743 = vpack.c.b16 %v569, %v566
    %v744 = vpack.c.b16 %v573, %v570
    %v745 = vpack.c.b16 %v574, %v571
    %v746 = vpack.c.b16 %v575, %v572
    %v747 = vpack.c.b16 %v579, %v576
    %v748 = vpack.c.b16 %v580, %v577
    %v749 = vpack.c.b16 %v581, %v578
    %v750 = vpack.c.b16 %v585, %v582
    %v751 = vpack.c.b16 %v586, %v583
    %v752 = vpack.c.b16 %v587, %v584
    %v753 = vpack.c.b16 %v591, %v588
    %v754 = vpack.c.b16 %v592, %v589
    %v755 = vpack.c.b16 %v593, %v590
    %v756 = vpack.c.b16 %v597, %v594
    %v757 = vpack.c.b16 %v598, %v595
    %v758 = vpack.c.b16 %v599, %v596
    %v759 = vpack.c.b16 %v603, %v600
    %v760 = vpack.c.b16 %v604, %v601
    %v761 = vpack.c.b16 %v605, %v602
    %v762 = vpack.c.b16 %v609, %v606
    %v763 = vpack.c.b16 %v610, %v607
    %v764 = vpack.c.b16 %v611, %v608
    %v765 = vpack.c.b16 %v615, %v612
    %v766 = vpack.c.b16 %v616, %v613
    %v767 = vpack.c.b16 %v617, %v614
    %v768 = vpack.c.b16 %v621, %v618
    %v769 = vpack.c.b16 %v622, %v619
    %v770 = vpack.c.b16 %v623, %v620
    %v771 = vpack.c.b16 %v627, %v624
    %v772 = vpack.c.b16 %v628, %v625
    %v773 = vpack.c.b16 %v629, %v626
    %v774 = vpack.c.b16 %v633, %v630
    %v775 = vpack.c.b16 %v634, %v631
    %v776 = vpack.c.b16 %v635, %v632
    %v777 = vpack.c.b16 %v639, %v636
    %v778 = vpack.c.b16 %v640, %v637
    %v779 = vpack.c.b16 %v641, %v638
    %v780 = vpack.c.b16 %v645, %v642
    %v781 = vpack.c.b16 %v646, %v643
    %v782 = vpack.c.b16 %v647, %v644
    %v783 = vpack.c.b16 %v651, %v648
    %v784 = vpack.c.b16 %v652, %v649
    %v785 = vpack.c.b16 %v653, %v650
    %v786 = vpack.c.b16 %v657, %v654
    %v787 = vpack.c.b16 %v658, %v655
    %v788 = vpack.c.b16 %v659, %v656
    %v789 = vpack.c.b16 %v663, %v660
    %v790 = vpack.c.b16 %v664, %v661
    %v791 = vpack.c.b16 %v665, %v662
    %v792 = vpack.c.b16 %v669, %v666
    %v793 = vpack.c.b16 %v670, %v667
    %v794 = vpack.c.b16 %v671, %v668
    %v795 = vpack.c.b16 %v675, %v672
    %v796 = vpack.c.b16 %v676, %v673
    %v797 = vpack.c.b16 %v677, %v674
    %v798 = vpack.c.b16 %v681, %v678
    %v799 = vpack.c.b16 %v682, %v679
    %v800 = vpack.c.b16 %v683, %v680
    %v801 = vpack.c.b16 %v687, %v684
    %v802 = vpack.c.b16 %v688, %v685
    %v803 = vpack.c.b16 %v689, %v686
    %v804 = vpack.c.b16 %v693, %v690
    %v805 = vpack.c.b16 %v694, %v691
    %v806 = vpack.c.b16 %v695, %v692
    %v807 = vpack.c.b16 %v699, %v696
    %v808 = vpack.c.b16 %v700, %v697
    %v809 = vpack.c.b16 %v701, %v698
    %v810 = vpack.c.b16 %v705, %v702
    %v811 = vpack.c.b16 %v706, %v703
    %v812 = vpack.c.b16 %v707, %v704
    %v813 = vpack.c.b16 %v711, %v708
    %v814 = vpack.c.b16 %v712, %v709
    %v815 = vpack.c.b16 %v713, %v710
    %v816 = vpack.c.b16 %v717, %v714
    %v817 = vpack.c.b16 %v718, %v715
    %v818 = vpack.c.b16 %v719, %v716
    %v819 = vpack.c.b16 %v723, %v720
    %v820 = vpack.c.b16 %v724, %v721
    %v821 = vpack.c.b16 %v725, %v722
    %918 = vmatprep.subr.bf16.mxu0 %v727
    %919 = vmatpush1.bf16.msra.mxu0 %v726
    %920 = vmatprep.subr.bf16.mxu0 %v730
    %921 = vmatpush1.bf16.msra.mxu0 %v729
    %922 = vmatprep.subr.bf16.mxu0 %v733
    %923 = vmatpush1.bf16.msra.mxu0 %v732
    %924 = vmatprep.subr.bf16.mxu0 %v736
    %925 = vmatpush1.bf16.msra.mxu0 %v735
    %926 = vmatprep.subr.bf16.mxu0 %v739
    %927 = vmatpush1.bf16.msra.mxu0 %v738
    %928 = vmatprep.subr.bf16.mxu0 %v742
    %929 = vmatpush1.bf16.msra.mxu0 %v741
    %930 = vmatprep.subr.bf16.mxu0 %v745
    %931 = vmatpush1.bf16.msra.mxu0 %v744
    %932 = vmatprep.subr.bf16.mxu0 %v748
    %933 = vmatpush1.bf16.msra.mxu0 %v747
    %934 = vmatprep.subr.bf16.mxu0 %v751
    %935 = vmatpush1.bf16.msra.mxu0 %v750
    %936 = vmatprep.subr.bf16.mxu0 %v754
    %937 = vmatpush1.bf16.msra.mxu0 %v753
    %938 = vmatprep.subr.bf16.mxu0 %v757
    %939 = vmatpush1.bf16.msra.mxu0 %v756
    %940 = vmatprep.subr.bf16.mxu0 %v760
    %941 = vmatpush1.bf16.msra.mxu0 %v759
    %942 = vmatprep.subr.bf16.mxu0 %v763
    %943 = vmatpush1.bf16.msra.mxu0 %v762
    %944 = vmatprep.subr.bf16.mxu0 %v766
    %945 = vmatpush1.bf16.msra.mxu0 %v765
    %946 = vmatprep.subr.bf16.mxu0 %v769
    %947 = vmatpush1.bf16.msra.mxu0 %v768
    %948 = vmatprep.subr.bf16.mxu0 %v772
    %949 = vmatpush1.bf16.msra.mxu0 %v771
    %950 = vmatprep.mubr.bf16.mxu0 %v275
    %951 = vmatmul.mubr.bf16.gmra.mrb[0].mxu0 %v274
    %v952 = vpop.f32.mrb[0].mxu0
    %v953 = vadd.f32 0.0, %v952
    %v954 = vpop.f32.mrb[0].mxu0
    %v955 = vadd.f32 0.0, %v954
    %v956 = vpop.f32.mrb[0].mxu0
    %v957 = vadd.f32 0.0, %v956
    %v958 = vpop.f32.mrb[0].mxu0
    %v959 = vadd.f32 0.0, %v958
    %960 = vdwg.mxu0
    %961 = vmatprep.subr.bf16.mxu0 %v775
    %962 = vmatpush1.bf16.msra.mxu0 %v774
    %963 = vmatprep.subr.bf16.mxu0 %v778
    %964 = vmatpush1.bf16.msra.mxu0 %v777
    %965 = vmatprep.subr.bf16.mxu0 %v781
    %966 = vmatpush1.bf16.msra.mxu0 %v780
    %967 = vmatprep.subr.bf16.mxu0 %v784
    %968 = vmatpush1.bf16.msra.mxu0 %v783
    %969 = vmatprep.subr.bf16.mxu0 %v787
    %970 = vmatpush1.bf16.msra.mxu0 %v786
    %971 = vmatprep.subr.bf16.mxu0 %v790
    %972 = vmatpush1.bf16.msra.mxu0 %v789
    %973 = vmatprep.subr.bf16.mxu0 %v793
    %974 = vmatpush1.bf16.msra.mxu0 %v792
    %975 = vmatprep.subr.bf16.mxu0 %v796
    %976 = vmatpush1.bf16.msra.mxu0 %v795
    %977 = vmatprep.subr.bf16.mxu0 %v799
    %978 = vmatpush1.bf16.msra.mxu0 %v798
    %979 = vmatprep.subr.bf16.mxu0 %v802
    %980 = vmatpush1.bf16.msra.mxu0 %v801
    %981 = vmatprep.subr.bf16.mxu0 %v805
    %982 = vmatpush1.bf16.msra.mxu0 %v804
    %983 = vmatprep.subr.bf16.mxu0 %v808
    %984 = vmatpush1.bf16.msra.mxu0 %v807
    %985 = vmatprep.subr.bf16.mxu0 %v811
    %986 = vmatpush1.bf16.msra.mxu0 %v810
    %987 = vmatprep.subr.bf16.mxu0 %v814
    %988 = vmatpush1.bf16.msra.mxu0 %v813
    %989 = vmatprep.subr.bf16.mxu0 %v817
    %990 = vmatpush1.bf16.msra.mxu0 %v816
    %991 = vmatprep.subr.bf16.mxu0 %v820
    %992 = vmatpush1.bf16.msra.mxu0 %v819
    %993 = vmatprep.mubr.bf16.mxu0 %v277
    %994 = vmatmul.mubr.bf16.gmra.mrb[0].mxu0 %v276
    %v995 = vpop.f32.mrb[0].mxu0
    %v996 = vadd.f32 %v953, %v995
    %v997 = vpop.f32.mrb[0].mxu0
    %v998 = vadd.f32 %v955, %v997
    %v999 = vpop.f32.mrb[0].mxu0
    %v1000 = vadd.f32 %v957, %v999
    %v1001 = vpop.f32.mrb[0].mxu0
    %v1002 = vadd.f32 %v959, %v1001
    %1003 = vdwg.mxu0
    %1004 = vmatprep.subr.bf16.mxu0 0
    %1005 = vmatpush1.bf16.msra.mxu0 %v728
    %1006 = vmatprep.subr.bf16.mxu0 0
    %1007 = vmatpush1.bf16.msra.mxu0 %v731
    %1008 = vmatprep.subr.bf16.mxu0 0
    %1009 = vmatpush1.bf16.msra.mxu0 %v734
    %1010 = vmatprep.subr.bf16.mxu0 0
    %1011 = vmatpush1.bf16.msra.mxu0 %v737
    %1012 = vmatprep.subr.bf16.mxu0 0
    %1013 = vmatpush1.bf16.msra.mxu0 %v740
    %1014 = vmatprep.subr.bf16.mxu0 0
    %1015 = vmatpush1.bf16.msra.mxu0 %v743
    %1016 = vmatprep.subr.bf16.mxu0 0
    %1017 = vmatpush1.bf16.msra.mxu0 %v746
    %1018 = vmatprep.subr.bf16.mxu0 0
    %1019 = vmatpush1.bf16.msra.mxu0 %v749
    %1020 = vmatprep.subr.bf16.mxu0 0
    %1021 = vmatpush1.bf16.msra.mxu0 %v752
    %1022 = vmatprep.subr.bf16.mxu0 0
    %1023 = vmatpush1.bf16.msra.mxu0 %v755
    %1024 = vmatprep.subr.bf16.mxu0 0
    %1025 = vmatpush1.bf16.msra.mxu0 %v758
    %1026 = vmatprep.subr.bf16.mxu0 0
    %1027 = vmatpush1.bf16.msra.mxu0 %v761
    %1028 = vmatprep.subr.bf16.mxu0 0
    %1029 = vmatpush1.bf16.msra.mxu0 %v764
    %1030 = vmatprep.subr.bf16.mxu0 0
    %1031 = vmatpush1.bf16.msra.mxu0 %v767
    %1032 = vmatprep.subr.bf16.mxu0 0
    %1033 = vmatpush1.bf16.msra.mxu0 %v770
    %1034 = vmatprep.subr.bf16.mxu0 0
    %1035 = vmatpush1.bf16.msra.mxu0 %v773
    %1036 = vmatprep.mubr.bf16.mxu0 %v275
    %1037 = vmatmul.mubr.bf16.gmra.mrb[0].mxu0 %v274
    %v1038 = vpop.f32.mrb[0].mxu0
    %v1039 = vadd.f32 0.0, %v1038
    %v1040 = vpop.f32.mrb[0].mxu0
    %v1041 = vpop.f32.mrb[0].mxu0
    %v1042 = vadd.f32 0.0, %v1041
    %v1043 = vpop.f32.mrb[0].mxu0
    %1044 = vdwg.mxu0
    %1045 = vmatprep.subr.bf16.mxu0 0
    %1046 = vmatpush1.bf16.msra.mxu0 %v776
    %1047 = vmatprep.subr.bf16.mxu0 0
    %1048 = vmatpush1.bf16.msra.mxu0 %v779
    %1049 = vmatprep.subr.bf16.mxu0 0
    %1050 = vmatpush1.bf16.msra.mxu0 %v782
    %1051 = vmatprep.subr.bf16.mxu0 0
    %1052 = vmatpush1.bf16.msra.mxu0 %v785
    %1053 = vmatprep.subr.bf16.mxu0 0
    %1054 = vmatpush1.bf16.msra.mxu0 %v788
    %1055 = vmatprep.subr.bf16.mxu0 0
    %1056 = vmatpush1.bf16.msra.mxu0 %v791
    %1057 = vmatprep.subr.bf16.mxu0 0
    %1058 = vmatpush1.bf16.msra.mxu0 %v794
    %1059 = vmatprep.subr.bf16.mxu0 0
    %1060 = vmatpush1.bf16.msra.mxu0 %v797
    %1061 = vmatprep.subr.bf16.mxu0 0
    %1062 = vmatpush1.bf16.msra.mxu0 %v800
    %1063 = vmatprep.subr.bf16.mxu0 0
    %1064 = vmatpush1.bf16.msra.mxu0 %v803
    %1065 = vmatprep.subr.bf16.mxu0 0
    %1066 = vmatpush1.bf16.msra.mxu0 %v806
    %1067 = vmatprep.subr.bf16.mxu0 0
    %1068 = vmatpush1.bf16.msra.mxu0 %v809
    %1069 = vmatprep.subr.bf16.mxu0 0
    %1070 = vmatpush1.bf16.msra.mxu0 %v812
    %1071 = vmatprep.subr.bf16.mxu0 0
    %1072 = vmatpush1.bf16.msra.mxu0 %v815
    %1073 = vmatprep.subr.bf16.mxu0 0
    %1074 = vmatpush1.bf16.msra.mxu0 %v818
    %1075 = vmatprep.subr.bf16.mxu0 0
    %1076 = vmatpush1.bf16.msra.mxu0 %v821
    %1077 = vmatprep.mubr.bf16.mxu0 %v277
    %1078 = vmatmul.mubr.bf16.gmra.mrb[0].mxu0 %v276
    %v1079 = vpop.f32.mrb[0].mxu0
    %v1080 = vadd.f32 %v1039, %v1079
    %v1081 = vpop.f32.mrb[0].mxu0
    %v1082 = vpop.f32.mrb[0].mxu0
    %v1083 = vadd.f32 %v1042, %v1082
    %v1084 = vpop.f32.mrb[0].mxu0
    %1085 = vdwg.mxu0
    %v1086 = vpack.c.bf16 %v1000, %v996
    %v1087 = vpack.c.bf16 %v1002, %v998
    %v1088 = vpack.c.bf16 %v1083, %v1080
    %v1089 = vld [vmem:[%s4] sm:$0x7]
    %v1091 = vlaneseq
    %v1092 = vshrl.u32 %v1091, 7
    %v1093 = vsub.s32 0, %v1092
    %v1094 = vrot.slane %v1089, %v1093
    %v1095 = vlaneseq
    %v1096 = vshrl.u32 %v1095, 7
    %v1097 = vsub.s32 1, %v1096
    %v1098 = vrot.slane %v1089, %v1097
    %v1099 = vlaneseq
    %v1100 = vshrl.u32 %v1099, 7
    %v1101 = vsub.s32 2, %v1100
    %v1102 = vrot.slane %v1089, %v1101
    %v1106 = vpack.c.bf16 %v1094, %v1094
    %v1107 = vpack.c.bf16 %v1098, %v1098
    %v1108 = vpack.c.bf16 %v1102, %v1102
    %v1110 = vpack.i.b16 %v1106, %v1106
    %v1112 = vlaneseq
    %v1113 = vshrl.u32 %v1112, 7
    %v1114 = vsub.s32 0, %v1113
    %v1115 = vrot.slane %v1110, %v1114
    %v1117 = vpack.i.b16 %v1107, %v1107
    %v1119 = vlaneseq
    %v1120 = vshrl.u32 %v1119, 7
    %v1121 = vsub.s32 0, %v1120
    %v1122 = vrot.slane %v1117, %v1121
    %v1124 = vpack.i.b16 %v1108, %v1108
    %v1126 = vlaneseq
    %v1127 = vshrl.u32 %v1126, 7
    %v1128 = vsub.s32 0, %v1127
    %v1129 = vrot.slane %v1124, %v1128
    %v1130 = vadd.bf16 %v1086, %v1115
    %v1131 = vadd.bf16 %v1087, %v1122
    %v1132 = vadd.bf16 %v1088, %v1129
    %v1133 = vmax.bf16 %v1130, 0
    %v1134 = vmax.bf16 %v1131, 0
    %v1135 = vmax.bf16 %v1132, 0
    %v1136 = vld [vmem:[#allocation8] sm:$0xf]
    %v1137 = vld [vmem:[#allocation8 + $0x4] sm:$0xf]
    %v1138 = vld [vmem:[#allocation8 + $0x8] sm:$0xf]
    %v1139 = vld [vmem:[#allocation8 + $0xc] sm:$0xf]
    %v1140 = vld [vmem:[#allocation8 + $0x10] sm:$0xf]
    %v1141 = vld [vmem:[#allocation8 + $0x14] sm:$0xf]
    %v1142 = vld [vmem:[#allocation8 + $0x18] sm:$0xf]
    %v1143 = vld [vmem:[#allocation8 + $0x1c] sm:$0xf]
    %v1144 = vld [vmem:[#allocation8 + $0x20] sm:$0xf]
    %v1145 = vld [vmem:[#allocation8 + $0x24] sm:$0xf]
    %v1146 = vld [vmem:[#allocation8 + $0x28] sm:$0xf]
    %v1147 = vld [vmem:[#allocation8 + $0x2c] sm:$0xf]
    %v1148 = vld [vmem:[#allocation8 + $0x30] sm:$0xf]
    %v1149 = vld [vmem:[#allocation8 + $0x34] sm:$0xf]
    %v1150 = vld [vmem:[#allocation8 + $0x38] sm:$0xf]
    %v1151 = vld [vmem:[#allocation8 + $0x3c] sm:$0xf]
    %v1152 = vld [vmem:[#allocation8 + $0x40] sm:$0xf]
    %v1153 = vld [vmem:[#allocation8 + $0x44] sm:$0xf]
    %v1154 = vld [vmem:[#allocation8 + $0x48] sm:$0xf]
    %v1155 = vld [vmem:[#allocation8 + $0x4c] sm:$0xf]
    %v1156 = vld [vmem:[#allocation8 + $0x50] sm:$0xf]
    %v1157 = vld [vmem:[#allocation8 + $0x54] sm:$0xf]
    %v1158 = vld [vmem:[#allocation8 + $0x58] sm:$0xf]
    %v1159 = vld [vmem:[#allocation8 + $0x5c] sm:$0xf]
    %v1160 = vld [vmem:[#allocation8 + $0x60] sm:$0xf]
    %v1161 = vld [vmem:[#allocation8 + $0x64] sm:$0xf]
    %v1162 = vld [vmem:[#allocation8 + $0x68] sm:$0xf]
    %v1163 = vld [vmem:[#allocation8 + $0x6c] sm:$0xf]
    %v1164 = vld [vmem:[#allocation8 + $0x70] sm:$0xf]
    %v1165 = vld [vmem:[#allocation8 + $0x74] sm:$0xf]
    %v1166 = vld [vmem:[#allocation8 + $0x78] sm:$0xf]
    %v1167 = vld [vmem:[#allocation8 + $0x7c] sm:$0xf]
    %v1168 = vld [vmem:[#allocation8 + $0x80] sm:$0xf]
    %v1169 = vld [vmem:[#allocation8 + $0x84] sm:$0xf]
    %v1170 = vld [vmem:[#allocation8 + $0x88] sm:$0xf]
    %v1171 = vld [vmem:[#allocation8 + $0x8c] sm:$0xf]
    %v1172 = vld [vmem:[#allocation8 + $0x90] sm:$0xf]
    %v1173 = vld [vmem:[#allocation8 + $0x94] sm:$0xf]
    %v1174 = vld [vmem:[#allocation8 + $0x98] sm:$0xf]
    %v1175 = vld [vmem:[#allocation8 + $0x9c] sm:$0xf]
    %v1176 = vld [vmem:[#allocation8 + $0xa0] sm:$0xf]
    %v1177 = vld [vmem:[#allocation8 + $0xa4] sm:$0xf]
    %v1178 = vld [vmem:[#allocation8 + $0xa8] sm:$0xf]
    %v1179 = vld [vmem:[#allocation8 + $0xac] sm:$0xf]
    %v1180 = vld [vmem:[#allocation8 + $0xb0] sm:$0xf]
    %v1181 = vld [vmem:[#allocation8 + $0xb4] sm:$0xf]
    %v1182 = vld [vmem:[#allocation8 + $0xb8] sm:$0xf]
    %v1183 = vld [vmem:[#allocation8 + $0xbc] sm:$0xf]
    %v1184 = vld [vmem:[%s6] sm:$0x1]
    %v1186 = vlaneseq
    %v1187 = vshrl.u32 %v1186, 7
    %v1188 = vsub.s32 0, %v1187
    %v1189 = vrot.slane %v1184, %v1188
    %v1239 = vunpack.c.l.b16 %v1136
    %v1240 = vunpack.c.l.b16 %v1137
    %v1241 = vunpack.c.l.b16 %v1138
    %v1242 = vunpack.c.l.b16 %v1139
    %v1243 = vunpack.c.l.b16 %v1140
    %v1244 = vunpack.c.l.b16 %v1141
    %v1245 = vunpack.c.l.b16 %v1142
    %v1246 = vunpack.c.l.b16 %v1143
    %v1247 = vunpack.c.l.b16 %v1144
    %v1248 = vunpack.c.l.b16 %v1145
    %v1249 = vunpack.c.l.b16 %v1146
    %v1250 = vunpack.c.l.b16 %v1147
    %v1251 = vunpack.c.l.b16 %v1148
    %v1252 = vunpack.c.l.b16 %v1149
    %v1253 = vunpack.c.l.b16 %v1150
    %v1254 = vunpack.c.l.b16 %v1151
    %v1255 = vunpack.c.l.b16 %v1152
    %v1256 = vunpack.c.l.b16 %v1153
    %v1257 = vunpack.c.l.b16 %v1154
    %v1258 = vunpack.c.l.b16 %v1155
    %v1259 = vunpack.c.l.b16 %v1156
    %v1260 = vunpack.c.l.b16 %v1157
    %v1261 = vunpack.c.l.b16 %v1158
    %v1262 = vunpack.c.l.b16 %v1159
    %v1263 = vunpack.c.l.b16 %v1160
    %v1264 = vunpack.c.l.b16 %v1161
    %v1265 = vunpack.c.l.b16 %v1162
    %v1266 = vunpack.c.l.b16 %v1163
    %v1267 = vunpack.c.l.b16 %v1164
    %v1268 = vunpack.c.l.b16 %v1165
    %v1269 = vunpack.c.l.b16 %v1166
    %v1270 = vunpack.c.l.b16 %v1167
    %v1271 = vunpack.c.l.b16 %v1168
    %v1272 = vunpack.c.l.b16 %v1169
    %v1273 = vunpack.c.l.b16 %v1170
    %v1274 = vunpack.c.l.b16 %v1171
    %v1275 = vunpack.c.l.b16 %v1172
    %v1276 = vunpack.c.l.b16 %v1173
    %v1277 = vunpack.c.l.b16 %v1174
    %v1278 = vunpack.c.l.b16 %v1175
    %v1279 = vunpack.c.l.b16 %v1176
    %v1280 = vunpack.c.l.b16 %v1177
    %v1281 = vunpack.c.l.b16 %v1178
    %v1282 = vunpack.c.l.b16 %v1179
    %v1283 = vunpack.c.l.b16 %v1180
    %v1284 = vunpack.c.l.b16 %v1181
    %v1285 = vunpack.c.l.b16 %v1182
    %v1286 = vunpack.c.l.b16 %v1183
    %v1287 = vpack.c.b16 %v1240, %v1239
    %v1288 = vpack.c.b16 %v1242, %v1241
    %v1289 = vpack.c.b16 %v1244, %v1243
    %v1290 = vpack.c.b16 %v1246, %v1245
    %v1291 = vpack.c.b16 %v1248, %v1247
    %v1292 = vpack.c.b16 %v1250, %v1249
    %v1293 = vpack.c.b16 %v1252, %v1251
    %v1294 = vpack.c.b16 %v1254, %v1253
    %v1295 = vpack.c.b16 %v1256, %v1255
    %v1296 = vpack.c.b16 %v1258, %v1257
    %v1297 = vpack.c.b16 %v1260, %v1259
    %v1298 = vpack.c.b16 %v1262, %v1261
    %v1299 = vpack.c.b16 %v1264, %v1263
    %v1300 = vpack.c.b16 %v1266, %v1265
    %v1301 = vpack.c.b16 %v1268, %v1267
    %v1302 = vpack.c.b16 %v1270, %v1269
    %v1303 = vpack.c.b16 %v1272, %v1271
    %v1304 = vpack.c.b16 %v1274, %v1273
    %v1305 = vpack.c.b16 %v1276, %v1275
    %v1306 = vpack.c.b16 %v1278, %v1277
    %v1307 = vpack.c.b16 %v1280, %v1279
    %v1308 = vpack.c.b16 %v1282, %v1281
    %v1309 = vpack.c.b16 %v1284, %v1283
    %v1310 = vpack.c.b16 %v1286, %v1285
    %1335 = vmatprep.subr.bf16.mxu0 0
    %1336 = vmatpush1.bf16.msra.mxu0 %v1287
    %1337 = vmatprep.subr.bf16.mxu0 0
    %1338 = vmatpush1.bf16.msra.mxu0 %v1288
    %1339 = vmatprep.subr.bf16.mxu0 0
    %1340 = vmatpush1.bf16.msra.mxu0 %v1289
    %1341 = vmatprep.subr.bf16.mxu0 0
    %1342 = vmatpush1.bf16.msra.mxu0 %v1290
    %1343 = vmatprep.subr.bf16.mxu0 0
    %1344 = vmatpush1.bf16.msra.mxu0 %v1291
    %1345 = vmatprep.subr.bf16.mxu0 0
    %1346 = vmatpush1.bf16.msra.mxu0 %v1292
    %1347 = vmatprep.subr.bf16.mxu0 0
    %1348 = vmatpush1.bf16.msra.mxu0 %v1293
    %1349 = vmatprep.subr.bf16.mxu0 0
    %1350 = vmatpush1.bf16.msra.mxu0 %v1294
    %1351 = vmatprep.subr.bf16.mxu0 0
    %1352 = vmatpush1.bf16.msra.mxu0 %v1295
    %1353 = vmatprep.subr.bf16.mxu0 0
    %1354 = vmatpush1.bf16.msra.mxu0 %v1296
    %1355 = vmatprep.subr.bf16.mxu0 0
    %1356 = vmatpush1.bf16.msra.mxu0 %v1297
    %1357 = vmatprep.subr.bf16.mxu0 0
    %1358 = vmatpush1.bf16.msra.mxu0 %v1298
    %1359 = vmatprep.subr.bf16.mxu0 0
    %1360 = vmatpush1.bf16.msra.mxu0 %v1299
    %1361 = vmatprep.subr.bf16.mxu0 0
    %1362 = vmatpush1.bf16.msra.mxu0 %v1300
    %1363 = vmatprep.subr.bf16.mxu0 0
    %1364 = vmatpush1.bf16.msra.mxu0 %v1301
    %1365 = vmatprep.subr.bf16.mxu0 0
    %1366 = vmatpush1.bf16.msra.mxu0 %v1302
    %1367 = vmatprep.mubr.bf16.mxu0 %v1134
    %1368 = vmatmul.mubr.bf16.gmra.mrb[0].mxu0 %v1133
    %v1369 = vpop.f32.mrb[0].mxu0
    %v1370 = vadd.f32 %v1189, %v1369
    %v1371 = vpop.f32.mrb[0].mxu0
    %v1372 = vpop.f32.mrb[0].mxu0
    %v1373 = vadd.f32 %v1189, %v1372
    %v1374 = vpop.f32.mrb[0].mxu0
    %1375 = vdwg.mxu0
    %1376 = vmatprep.subr.bf16.mxu0 0
    %1377 = vmatpush1.bf16.msra.mxu0 %v1303
    %1378 = vmatprep.subr.bf16.mxu0 0
    %1379 = vmatpush1.bf16.msra.mxu0 %v1304
    %1380 = vmatprep.subr.bf16.mxu0 0
    %1381 = vmatpush1.bf16.msra.mxu0 %v1305
    %1382 = vmatprep.subr.bf16.mxu0 0
    %1383 = vmatpush1.bf16.msra.mxu0 %v1306
    %1384 = vmatprep.subr.bf16.mxu0 0
    %1385 = vmatpush1.bf16.msra.mxu0 %v1307
    %1386 = vmatprep.subr.bf16.mxu0 0
    %1387 = vmatpush1.bf16.msra.mxu0 %v1308
    %1388 = vmatprep.subr.bf16.mxu0 0
    %1389 = vmatpush1.bf16.msra.mxu0 %v1309
    %1390 = vmatprep.subr.bf16.mxu0 0
    %1391 = vmatpush1.bf16.msra.mxu0 %v1310
    %1392 = vmatprep.subr.bf16.mxu0 0
    %1393 = vmatpush1.bf16.msra.mxu0 0
    %1394 = vmatprep.subr.bf16.mxu0 0
    %1395 = vmatpush1.bf16.msra.mxu0 0
    %1396 = vmatprep.subr.bf16.mxu0 0
    %1397 = vmatpush1.bf16.msra.mxu0 0
    %1398 = vmatprep.subr.bf16.mxu0 0
    %1399 = vmatpush1.bf16.msra.mxu0 0
    %1400 = vmatprep.subr.bf16.mxu0 0
    %1401 = vmatpush1.bf16.msra.mxu0 0
    %1402 = vmatprep.subr.bf16.mxu0 0
    %1403 = vmatpush1.bf16.msra.mxu0 0
    %1404 = vmatprep.subr.bf16.mxu0 0
    %1405 = vmatpush1.bf16.msra.mxu0 0
    %1406 = vmatprep.subr.bf16.mxu0 0
    %1407 = vmatpush1.bf16.msra.mxu0 0
    %1408 = vmatprep.mubr.bf16.mxu0 0
    %1409 = vmatmul.mubr.bf16.gmra.mrb[0].mxu0 %v1135
    %v1410 = vpop.f32.mrb[0].mxu0
    %v1411 = vadd.f32 %v1370, %v1410
    %v1412 = vpop.f32.mrb[0].mxu0
    %v1413 = vpop.f32.mrb[0].mxu0
    %v1414 = vadd.f32 %v1373, %v1413
    %v1415 = vpop.f32.mrb[0].mxu0
    %1416 = vdwg.mxu0
    %v1417 = vtanh.pop %v1411
    %v1418 = vtanh.pop %v1414
    %1419 = vst [vmem:[#allocation10] sm:$0xff] %v1417
    %1420 = vst [vmem:[#allocation10 + $0x8] sm:$0xff] %v1418
    // Predicated region
    $region46: #{tpu_custom_call.1} parent=1 // pred_check
      _
    $region47: #{tpu_custom_call.1} parent=1 // pred_check_branch
      %1422 = sbr.rel (0) target = $region49
    $region48: #{tpu_custom_call.1} parent=1 // pred_region
      %s1424 = ssub.s32 256, 256
      %1425 = vsyncadd [#allocation4], %s1424
      %s1426 = sshll.u32 [#allocation10], 4
      %s1427 = int_to_ptr.vmem [resolvable:$true] %s1426
      %1432 = dma.vmem_to_hbm [thread:$0]  %s1427, 256, %s7, [#allocation4], 128, 128, 8
    $region49: #{tpu_custom_call.1} parent=1 // pred_fallthru
      _
    // Predicated region
    $region50: #{tpu_custom_call.1} parent=1 // pred_check
      _
    $region51: #{tpu_custom_call.1} parent=1 // pred_check_branch
      %1434 = sbr.rel (0) target = $region53
    $region52: #{tpu_custom_call.1} parent=1 // pred_region
      %1435 = dma.done [#allocation4], 256
    $region53: #{tpu_custom_call.1} parent=1 // pred_fallthru
      _
    %1436 = vsyncpa [#allocation3], 1
    %1437 = vsyncpa [#allocation6], 1
    %1438 = vsyncpa [#allocation9], 1
    %1439 = vsyncpa [#allocation4], 1

</llo_original>
